<compile_context>
chip_gen: v5e
topology: v5e:2x2
jax: 0.10.0
libtpu: 0.0.40
codegen_flags: <defaults>
</compile_context>

<pallas_src>
import math

import jax
import jax.numpy as jnp
from jax.experimental import pallas as pl
from jax.experimental.pallas import tpu as pltpu


# ---------------------------------------------------------------------------
# Kernel: straight copy of one (tile_rows, lane_width) block.
# ---------------------------------------------------------------------------
def _identity_kernel(x_ref, o_ref):
    o_ref[...] = x_ref[...]


def _sublane_multiple(dtype) -> int:
    itemsize = jnp.dtype(dtype).itemsize
    return {4: 8, 2: 16, 1: 32}.get(itemsize, 8)


def identity_map(
    x,
    *,
    block_bytes: int = 2 * 1024 * 1024,   # ~2 MiB per block (~8 MiB live w/ double buffering)
    min_kernel_bytes: int = 1 << 20,      # below this, a kernel launch costs more than it moves
    donate: bool = False,                 # set True only if the caller donates x
    force_kernel: bool = False,
):
    """Identity forward. Returns x directly when a copy would be pure overhead;
    otherwise performs a tiled, lane-dense Pallas HBM->VMEM->HBM copy."""
    # Rank-0 / zero-sized inputs: nothing to DMA.
    if x.ndim == 0 or x.size == 0:
        return x

    # True identity: 0 bytes moved. Only run the copy kernel when asked to,
    # or when the input is large enough that launch overhead is negligible.
    if not force_kernel and x.nbytes < min_kernel_bytes:
        return x

    orig_shape = x.shape
    total = int(math.prod(orig_shape))
    itemsize = jnp.dtype(x.dtype).itemsize
    sub_mult = _sublane_multiple(x.dtype)

    # ----- Lane-dense 2-D view ------------------------------------------------
    # Prefer a wide lane dimension that is a large multiple of 128 so stores are
    # unmasked vst and each DMA row is a long contiguous run. Fall back to the
    # natural (rows, last) view (full-dim last block is always legal) when the
    # total size doesn't factor nicely.
    lane_width = None
    for cand in (32768, 16384, 8192, 4096, 2048, 1024, 512, 256, 128):
        if total % cand == 0:
            lane_width = cand
            break
    if lane_width is None:
        lane_width = orig_shape[-1]
        rows = total // lane_width
    else:
        rows = total // lane_width

    x2 = x.reshape(rows, lane_width)  # contiguous reshape: metadata-only

    # ----- Byte-sized row tile ------------------------------------------------
    row_bytes = lane_width * itemsize
    if rows * row_bytes <= block_bytes or rows <= sub_mult:
        tile = rows                                  # single full-extent block
    else:
        tile = (block_bytes // row_bytes) // sub_mult * sub_mult
        tile = max(sub_mult, tile)
        tile = min(tile, rows)

    grid = (pl.cdiv(rows, tile),)

    compiler_params = pltpu.CompilerParams(
        dimension_semantics=("parallel",) if grid[0] > 1 else ("arbitrary",),
        vmem_limit_bytes=32 * 1024 * 1024,           # safe on v5e/v6e/v7x
    )

    call_kwargs = {}
    if donate:
        # Halves the HBM footprint when the caller actually donates x.
        call_kwargs["input_output_aliases"] = {0: 0}

    out2 = pl.pallas_call(
        _identity_kernel,
        out_shape=jax.ShapeDtypeStruct((rows, lane_width), x.dtype),
        grid=grid,
        in_specs=[pl.BlockSpec((tile, lane_width), lambda i: (i, 0))],
        out_specs=pl.BlockSpec((tile, lane_width), lambda i: (i, 0)),
        compiler_params=compiler_params,
        cost_estimate=pl.CostEstimate(
            flops=0, transcendentals=0, bytes_accessed=2 * x.nbytes),
        **call_kwargs,
    )(x2)

    return out2.reshape(orig_shape)


# ---------------------------------------------------------------------------
# Module wrapper mirroring the PyTorch IdentityMap
# ---------------------------------------------------------------------------
class IdentityMapPallas:
    def __init__(self):
        pass

    def __call__(self, x, *args, **kwargs):
        # Extra positional / keyword args are accepted and ignored, exactly
        # like the PyTorch module.
        return identity_map(x)

    @property
    def config(self):
        return {"mm_projector_type": "identity"}


if __name__ == "__main__":
    # Shapes consistent with an mm_projector input: (batch, seq, hidden)
    B, S, H = 2, 8, 32
    key = jax.random.PRNGKey(0)
    x = jax.random.normal(key, (B, S, H), jnp.float32)

    module = IdentityMapPallas()

    # 1) Default path for a tiny input: no-kernel bypass (the true identity).
    out_bypass = module(x, "ignored_positional", some_kwarg=123)
    out_bypass = jax.block_until_ready(out_bypass)
    assert out_bypass.shape == x.shape
    assert out_bypass.dtype == x.dtype
    assert bool(jnp.all(out_bypass == x)), "bypass path altered the data"

    # 2) Forced kernel path: proves the lane-dense Pallas copy compiles & runs.
    out_kernel = identity_map(x, force_kernel=True)
    out_kernel = jax.block_until_ready(out_kernel)
    assert out_kernel.shape == x.shape
    assert out_kernel.dtype == x.dtype
    assert bool(jnp.all(out_kernel == x)), "identity kernel altered the data"

    assert module.config == {"mm_projector_type": "identity"}

    print("KERNEL_OK")
</pallas_src>

<mosaic_0001>
module attributes {stable_mosaic.version = 11 : i64} {
  func.func @_identity_kernel(%arg0: i32, %arg1: memref<1x512xf32, #tpu.memory_space<vmem>>, %arg2: memref<1x512xf32, #tpu.memory_space<vmem>>) attributes {dimension_semantics = [#tpu.dimension_semantics<arbitrary>], iteration_bounds = array<i64: 1>, scalar_prefetch = 0 : i64, scratch_operands = 0 : i64, tpu.core_type = #tpu.core_type<tc>, window_params = [{transform_indices = @transform_0, window_bounds = array<i64: 1, 512>}, {transform_indices = @transform_1, window_bounds = array<i64: 1, 512>}]} {
    %c0 = arith.constant 0 : index
    %c0_0 = arith.constant 0 : index
    %0 = vector.load %arg1[%c0, %c0_0] : memref<1x512xf32, #tpu.memory_space<vmem>>, vector<1x512xf32>
    %c0_1 = arith.constant 0 : index
    %c0_2 = arith.constant 0 : index
    %1 = vector.load %arg2[%c0_1, %c0_2] : memref<1x512xf32, #tpu.memory_space<vmem>>, vector<1x512xf32>
    tpu.vector_store %arg2[%c0_1, %c0_2], %0 {strides = array<i32>} : memref<1x512xf32, #tpu.memory_space<vmem>>, vector<1x512xf32>,
    return
  }
  func.func @transform_0(%arg0: i32) -> (i32, i32) {
    %c0_i32 = arith.constant 0 : i32
    %c0_i32_0 = arith.constant 0 : i32
    return %arg0, %c0_i32 : i32, i32
  }
  func.func @transform_1(%arg0: i32) -> (i32, i32) {
    %c0_i32 = arith.constant 0 : i32
    %c0_i32_0 = arith.constant 0 : i32
    return %arg0, %c0_i32 : i32, i32
  }
}

</mosaic_0001>

<llo_original>
// kernel: tpu_custom_call.1
$region0: #{tpu_custom_call.1}
  #allocation0 [shape = 'u32[]', space=smem, size = 0x4, offset = 0x4, fixed_abs, tag = 'smem constant byte address 0x4 - core index']
  #allocation1 [shape = 'u32[72,128]{1,0:T(1,128)}', space=vmem, size = 0x9000, scoped, tag = 'internal scratch']
  %s0 = inlined_call_operand.hbm [shape: f32[1,512], index: 0, kind: input, shape index: {}]
  %s1 = inlined_call_operand.hbm [shape: f32[1,512], index: 1, kind: output, shape index: {}]
  %s2 = sld [smem:[#allocation0]]
  $region18: #{tpu_custom_call.1} parent=0
    _
  %s4 = ssub.s32 1, %s2
  %s5 = scalar_select 0, %s4, %s2
  $region1: #{tpu_custom_call.1} parent=0
    #allocation2 [shape = 'u8[2048]{0}', space=vmem, size = 0x800, scoped, tag = 'input window, operand 0, single buffered']
    #allocation3 [shape = 's32[1]{0}', space=sflag, size = 0x4, scoped, tag = 'scoped memory for tpu_custom_call.1']
    #allocation4 [shape = 's32[1]{0}', space=sflag, size = 0x4, scoped, tag = 'scoped memory for tpu_custom_call.1']
    #allocation5 [shape = 'u8[2048]{0}', space=vmem, size = 0x800, scoped, tag = 'output window, operand 0, single buffered']
    %6 = vsyncpa [#allocation3], 0
    %7 = vsyncpa [#allocation4], 0
    // Predicated region
    $region2: #{tpu_custom_call.1} parent=1 // pred_check
      _
    $region3: #{tpu_custom_call.1} parent=1 // pred_check_branch
      %9 = sbr.rel (0) target = $region5
    $region4: #{tpu_custom_call.1} parent=1 // pred_region
      %11 = vsyncadd [#allocation3], 0
      %s13 = sshll.u32 %s0, 4
      %s14 = int_to_ptr.hbm [resolvable:$true] %s13
      %s15 = sshll.u32 [#allocation2], 4
      %s16 = int_to_ptr.vmem [resolvable:$true] %s15
      %18 = dma.hbm_to_vmem [thread:$0]  %s14, 64, %s16, [#allocation3]
    $region5: #{tpu_custom_call.1} parent=1 // pred_fallthru
      _
    // Predicated region
    $region6: #{tpu_custom_call.1} parent=1 // pred_check
      _
    $region7: #{tpu_custom_call.1} parent=1 // pred_check_branch
      %20 = sbr.rel (0) target = $region9
    $region8: #{tpu_custom_call.1} parent=1 // pred_region
      %22 = dma.done [#allocation3], 64
    $region9: #{tpu_custom_call.1} parent=1 // pred_fallthru
      _
    %v23 = vld [vmem:[#allocation2] sm:$0xf]
    %v24 = vlaneseq
    %vm25 = vcmp.ge.s32.totalorder %v24, 0
    %vm26 = vcmp.lt.s32.totalorder %v24, 512
    %vm27 = vmand %vm25, %vm26
    %28 = vst.msk [vmem:[#allocation5] sm:$0xf] %vm27, %v23
    // Predicated region
    $region10: #{tpu_custom_call.1} parent=1 // pred_check
      _
    $region11: #{tpu_custom_call.1} parent=1 // pred_check_branch
      %30 = sbr.rel (0) target = $region13
    $region12: #{tpu_custom_call.1} parent=1 // pred_region
      %32 = vsyncadd [#allocation4], 0
      %s34 = sshll.u32 [#allocation5], 4
      %s35 = int_to_ptr.vmem [resolvable:$true] %s34
      %s36 = sshll.u32 %s1, 4
      %s37 = int_to_ptr.hbm [resolvable:$true] %s36
      %39 = dma.vmem_to_hbm [thread:$0]  %s35, 64, %s37, [#allocation4]
    $region13: #{tpu_custom_call.1} parent=1 // pred_fallthru
      _
    // Predicated region
    $region14: #{tpu_custom_call.1} parent=1 // pred_check
      _
    $region15: #{tpu_custom_call.1} parent=1 // pred_check_branch
      %41 = sbr.rel (0) target = $region17
    $region16: #{tpu_custom_call.1} parent=1 // pred_region
      %43 = dma.done [#allocation4], 64
    $region17: #{tpu_custom_call.1} parent=1 // pred_fallthru
      _
    %44 = vsyncpa [#allocation3], 1
    %45 = vsyncpa [#allocation4], 1

</llo_original>
